<compile_context>
chip_gen: v5e
topology: v5e:2x2
jax: 0.10.0
libtpu: 0.0.40
codegen_flags: <defaults>
</compile_context>

<pallas_src>
import math

import jax
import jax.numpy as jnp
from jax.experimental import pallas as pl
from jax.experimental.pallas import tpu as pltpu

TWO_PI = 2.0 * math.pi
INV_TWO_PI = 1.0 / TWO_PI


# --------------------------------------------------------------------------- #
# Kernel
# --------------------------------------------------------------------------- #
def _mod2pi_kernel(phase_ref, u_ref, phi_ref):
    """phi = (u + phase) mod 2π.

    phase_ref: (1, 1) f32 scalar in SMEM; u_ref / phi_ref: (tile_rows, lanes) in VMEM.
    Divide-free floor-mod: multiply-by-reciprocal + floor stay in the 4-wide VALU
    slots, which have plenty of slack at the HBM roofline.
    """
    theta = phase_ref[0, 0]
    x = u_ref[...].astype(jnp.float32) + theta
    r = x - jnp.floor(x * jnp.float32(INV_TWO_PI)) * jnp.float32(TWO_PI)
    # Edge guards keep r in [0, 2π) like torch.remainder.
    # NOTE: inputs an ULP below a multiple of 2π land on 0.0 rather than
    # just-under-2π; the two are circularly identical.  For |u + phase| ≳ 1e4
    # f32 precision degrades exactly as torch's fp32 remainder does.
    r = jnp.where(r >= jnp.float32(TWO_PI), r - jnp.float32(TWO_PI), r)
    r = jnp.maximum(r, jnp.float32(0.0))
    phi_ref[...] = r.astype(phi_ref.dtype)


# --------------------------------------------------------------------------- #
# Tiling helpers
# --------------------------------------------------------------------------- #
def _vmem_budgets():
    """Generation-aware (per-buffer tile budget bytes, scoped VMEM limit bytes)."""
    try:
        vmem_cap = int(pltpu.get_tpu_info().vmem_capacity_bytes)
    except Exception:
        vmem_cap = 64 * 1024 * 1024  # conservative (v7x-sized) default
    if vmem_cap >= 128 * 1024 * 1024:
        # v5e / v6e / v5p: 128 MiB VMEM — bigger tiles amortize ~0.35 µs/step.
        # Double-buffered in+out at 8 MiB each is 32 MiB, well inside 64 MiB.
        return 8 * 1024 * 1024, 64 * 1024 * 1024
    # v7x: 64 MiB per TC — keep 4 MiB tiles (16 MiB buffered) under a 32 MiB limit.
    return 4 * 1024 * 1024, 32 * 1024 * 1024


def _pick_rows_tile(rows, row_bytes, budget_bytes, pack):
    """Rows per tile: full extent if it fits, else a pack-aligned size near the
    budget, preferring an exact divisor of `rows` (no partial last block)."""
    if rows * row_bytes <= budget_bytes:
        return rows
    cap = (budget_bytes // row_bytes) // pack * pack
    if cap <= 0:
        return 0  # not even `pack` rows fit the budget — caller picks a fallback layout
    cap = min(cap, rows)
    t = cap
    while t >= max(pack, cap // 2):
        if rows % t == 0:
            return t  # exact divisor: every grid step is a full, unmasked block
        t -= pack
    return cap  # partial last block (masked DMA/vst) — still correct


def _mod2pi_call(view, phase_smem, out_dtype, tile_rows, vmem_limit):
    """Run the streaming kernel over a 2-D view with a 1-D row grid."""
    rows, lanes = view.shape
    grid = (pl.cdiv(rows, tile_rows),)

    def build(dim_sem):
        return pl.pallas_call(
            _mod2pi_kernel,
            out_shape=jax.ShapeDtypeStruct((rows, lanes), out_dtype),
            grid=grid,
            in_specs=[
                pl.BlockSpec(memory_space=pltpu.SMEM),               # phase scalar
                pl.BlockSpec((tile_rows, lanes), lambda i: (i, 0)),  # u tile
            ],
            out_specs=pl.BlockSpec((tile_rows, lanes), lambda i: (i, 0)),
            compiler_params=pltpu.CompilerParams(
                dimension_semantics=(dim_sem,),
                vmem_limit_bytes=vmem_limit,
            ),
        )(phase_smem, view)

    if grid[0] > 1:
        # CORE_PARALLEL genuinely shards the row axis across v7x's two
        # TensorCores (the plain "parallel" string does not change codegen on
        # its own); it is a harmless 1-way split on single-TC v5e/v6e.  Fall
        # back to PARALLEL if this generation/toolchain rejects it.
        try:
            return build(pltpu.CORE_PARALLEL)
        except Exception:
            pass
    return build(pltpu.PARALLEL)


# --------------------------------------------------------------------------- #
# Public forward
# --------------------------------------------------------------------------- #
def dummy_flow_forward(u: jax.Array, phase) -> tuple[jax.Array, jax.Array]:
    """Pallas implementation of DummyFlow.forward.

    Args:
      u:     (batch, n) float array of angles (f32 or bf16).
      phase: scalar parameter (the module's `phase`).

    Returns:
      (phi, ldj) with phi = mod_2pi(u + phase) in u's dtype, ldj = zeros((batch, 1)).
    """
    assert u.ndim == 2, "DummyFlow expects (batch, n) angle tensors"
    batch, n = u.shape
    out_dtype = u.dtype
    total = batch * n

    phase_smem = jnp.reshape(jnp.asarray(phase, dtype=jnp.float32), (1, 1))

    tile_base, vmem_limit = _vmem_budgets()
    itemsize = jnp.dtype(u.dtype).itemsize          # TRUE element size (bf16 = 2)
    pack = 8 * max(1, 4 // itemsize)                # sublane pack: 8 f32 / 16 bf16 / 32 i8

    # Lane-dense slab layout when the element count allows a free reshape.
    lanes = next((L for L in (1024, 512, 256, 128) if total % L == 0), None)

    if lanes is not None:
        rows = total // lanes
        view = jnp.reshape(u, (rows, lanes))        # metadata-only reshape
        tile_rows = _pick_rows_tile(rows, lanes * itemsize, tile_base, pack)
        phi_view = _mod2pi_call(view, phase_smem, out_dtype, tile_rows, vmem_limit)
        phi = jnp.reshape(phi_view, (batch, n))
    else:
        # Ragged element count: tile (batch, n) directly.  A full-extent last
        # dim is exempt from the 128-lane divisibility rule, so no pad/unpad
        # HBM round trips — only the lane tail of each store is masked.
        tile_rows = _pick_rows_tile(batch, n * itemsize, tile_base, pack)
        if tile_rows > 0:
            phi = _mod2pi_call(u, phase_smem, out_dtype, tile_rows, vmem_limit)
        else:
            # Pathological: a single ragged row exceeds the tile budget.  Fall
            # back to the padded 128-lane slab (costs one extra pad/slice pass).
            lanes = 128
            padded = pl.cdiv(total, lanes) * lanes
            flat = jnp.pad(jnp.reshape(u, (total,)), (0, padded - total))
            rows = padded // lanes
            view = jnp.reshape(flat, (rows, lanes))
            tile_rows = _pick_rows_tile(rows, lanes * itemsize, tile_base, pack)
            phi_view = _mod2pi_call(view, phase_smem, out_dtype, tile_rows, vmem_limit)
            phi = jnp.reshape(jnp.reshape(phi_view, (padded,))[:total], (batch, n))

    # φ.new_zeros(φ.shape[0], 1) — trivial glue; plain XLA is already optimal.
    ldj = jnp.zeros((batch, 1), dtype=phi.dtype)
    return phi, ldj


# --------------------------------------------------------------------------- #
# Self-test
# --------------------------------------------------------------------------- #
def _circular_close(a, b, tol):
    """Angles-mod-2π comparison (values near 0 and near 2π are equivalent)."""
    d = jnp.abs(a - b)
    return bool(jnp.all(jnp.minimum(d, TWO_PI - d) < tol))


if __name__ == "__main__":
    key = jax.random.PRNGKey(0)
    phase = jnp.float32(0.5)  # module inits phase=0.0; nonzero makes the shift visible
    k1, k2, k3, k4 = jax.random.split(key, 4)

    # Case 1: lane-aligned f32 (slab path).
    u1 = jax.random.uniform(k1, (8, 128), jnp.float32,
                            minval=-4.0 * math.pi, maxval=4.0 * math.pi)
    phi1, ldj1 = dummy_flow_forward(u1, phase)

    # Case 2: ragged shape (direct (batch, n) tiling — no pad/unpad pass).
    u2 = jax.random.uniform(k2, (4, 7), jnp.float32,
                            minval=-4.0 * math.pi, maxval=4.0 * math.pi)
    phi2, ldj2 = dummy_flow_forward(u2, phase)

    # Case 3: bf16 lane-aligned (true-itemsize tile budget, 16-row sublane pack).
    u3 = jax.random.uniform(k3, (16, 256), jnp.float32,
                            minval=-4.0 * math.pi, maxval=4.0 * math.pi).astype(jnp.bfloat16)
    phi3, ldj3 = dummy_flow_forward(u3, phase)

    # Case 4: force a multi-step grid (exercises the CORE_PARALLEL / fallback path).
    u4 = jax.random.uniform(k4, (32, 128), jnp.float32,
                            minval=-4.0 * math.pi, maxval=4.0 * math.pi)
    phase_smem = jnp.reshape(jnp.asarray(phase, dtype=jnp.float32), (1, 1))
    phi4 = _mod2pi_call(u4, phase_smem, u4.dtype, tile_rows=8,
                        vmem_limit=32 * 1024 * 1024)

    jax.block_until_ready((phi1, ldj1, phi2, ldj2, phi3, ldj3, phi4))

    cases = (
        (u1, phi1, ldj1, 1e-4),
        (u2, phi2, ldj2, 1e-4),
        (u3, phi3, ldj3, 5e-2),   # bf16 rounding near 2π
    )
    for u, phi, ldj, tol in cases:
        ref = jnp.mod(u.astype(jnp.float32) + phase, TWO_PI)  # torch.remainder semantics
        assert phi.shape == u.shape and phi.dtype == u.dtype
        assert ldj.shape == (u.shape[0], 1)
        p32 = phi.astype(jnp.float32)
        assert _circular_close(p32, ref, tol)
        assert bool(jnp.all((p32 >= 0.0) & (p32 < TWO_PI + 1e-3)))
        assert bool(jnp.all(ldj == 0.0))

    ref4 = jnp.mod(u4 + phase, TWO_PI)
    assert phi4.shape == u4.shape and phi4.dtype == u4.dtype
    assert _circular_close(phi4, ref4, 1e-4)
    assert bool(jnp.all((phi4 >= 0.0) & (phi4 < TWO_PI + 1e-3)))

    print("KERNEL_OK")
</pallas_src>

<mosaic_0001>
module attributes {stable_mosaic.version = 11 : i64} {
  func.func @_mod2pi_kernel(%arg0: i32, %arg1: memref<1x1xf32, #tpu.memory_space<smem>>, %arg2: memref<1x1024xf32, #tpu.memory_space<vmem>>, %arg3: memref<1x1024xf32, #tpu.memory_space<vmem>>) attributes {dimension_semantics = [#tpu.dimension_semantics<parallel>], iteration_bounds = array<i64: 1>, scalar_prefetch = 0 : i64, scratch_operands = 0 : i64, tpu.core_type = #tpu.core_type<tc>, window_params = [{transform_indices = @transform_0, window_bounds = array<i64: 1, 1>}, {transform_indices = @transform_1, window_bounds = array<i64: 1, 1024>}, {transform_indices = @transform_2, window_bounds = array<i64: 1, 1024>}]} {
    %c0 = arith.constant 0 : index
    %c0_0 = arith.constant 0 : index
    %0 = memref.load %arg1[%c0, %c0_0] : memref<1x1xf32, #tpu.memory_space<smem>>
    %c0_1 = arith.constant 0 : index
    %c0_2 = arith.constant 0 : index
    %1 = vector.load %arg2[%c0_1, %c0_2] : memref<1x1024xf32, #tpu.memory_space<vmem>>, vector<1x1024xf32>
    %2 = vector.broadcast %0 : f32 to vector<1x1024xf32>
    %3 = arith.addf %1, %2 : vector<1x1024xf32>
    %cst = arith.constant 0.159154937 : f32
    %4 = vector.broadcast %cst : f32 to vector<1x1024xf32>
    %5 = arith.mulf %3, %4 : vector<1x1024xf32>
    %6 = math.floor %5 : vector<1x1024xf32>
    %cst_3 = arith.constant 6.28318548 : f32
    %7 = vector.broadcast %cst_3 : f32 to vector<1x1024xf32>
    %8 = arith.mulf %6, %7 : vector<1x1024xf32>
    %9 = arith.subf %3, %8 : vector<1x1024xf32>
    %cst_4 = arith.constant 6.28318548 : f32
    %10 = vector.broadcast %cst_4 : f32 to vector<1x1024xf32>
    %11 = arith.cmpf oge, %9, %10 : vector<1x1024xf32>
    %cst_5 = arith.constant 6.28318548 : f32
    %12 = vector.broadcast %cst_5 : f32 to vector<1x1024xf32>
    %13 = arith.subf %9, %12 : vector<1x1024xf32>
    %14 = arith.select %11, %13, %9 : vector<1x1024xi1>, vector<1x1024xf32>
    %cst_6 = arith.constant 0.000000e+00 : f32
    %15 = vector.broadcast %cst_6 : f32 to vector<1x1024xf32>
    %16 = arith.maximumf %14, %15 : vector<1x1024xf32>
    %c0_7 = arith.constant 0 : index
    %c0_8 = arith.constant 0 : index
    %17 = vector.load %arg3[%c0_7, %c0_8] : memref<1x1024xf32, #tpu.memory_space<vmem>>, vector<1x1024xf32>
    tpu.vector_store %arg3[%c0_7, %c0_8], %16 {strides = array<i32>} : memref<1x1024xf32, #tpu.memory_space<vmem>>, vector<1x1024xf32>,
    return
  }
  func.func @transform_0(%arg0: i32) -> (i32, i32) {
    %c0_i32 = arith.constant 0 : i32
    %c0_i32_0 = arith.constant 0 : i32
    %c0_i32_1 = arith.constant 0 : i32
    return %c0_i32, %c0_i32_0 : i32, i32
  }
  func.func @transform_1(%arg0: i32) -> (i32, i32) {
    %c0_i32 = arith.constant 0 : i32
    %c0_i32_0 = arith.constant 0 : i32
    return %arg0, %c0_i32 : i32, i32
  }
  func.func @transform_2(%arg0: i32) -> (i32, i32) {
    %c0_i32 = arith.constant 0 : i32
    %c0_i32_0 = arith.constant 0 : i32
    return %arg0, %c0_i32 : i32, i32
  }
}

</mosaic_0001>

<llo_original>
// kernel: tpu_custom_call.1
$region0: #{tpu_custom_call.1}
  #allocation0 [shape = 'u32[]', space=smem, size = 0x4, offset = 0x4, fixed_abs, tag = 'smem constant byte address 0x4 - core index']
  #allocation1 [shape = 'u32[72,128]{1,0:T(1,128)}', space=vmem, size = 0x9000, scoped, tag = 'internal scratch']
  #allocation2 [shape = 'f32[1,1]{1,0:T(1,128)S(6)}', space=smem, size = 0x200, scoped, tag = 'scoped memory for tpu_custom_call.1']
  %s0 = inlined_call_operand.<no memory space> [shape: f32[1,1], index: 0, kind: input, shape index: {}]
  %s1 = inlined_call_operand.hbm [shape: f32[1,1024], index: 1, kind: input, shape index: {}]
  %s2 = inlined_call_operand.hbm [shape: f32[1,1024], index: 2, kind: output, shape index: {}]
  %s3 = sld [smem:[#allocation0]]
  $region22: #{tpu_custom_call.1} parent=0
    _
  %s5 = ssub.s32 1, %s3
  %s6 = scalar_select 0, %s5, %s3
  %7 = sst [smem:[#allocation2]] %s0
  $region1: #{tpu_custom_call.1} parent=0
    #allocation3 [shape = 'u8[4096]{0}', space=vmem, size = 0x1000, scoped, tag = 'input window, operand 1, single buffered']
    #allocation4 [shape = 's32[1]{0}', space=sflag, size = 0x4, scoped, tag = 'scoped memory for tpu_custom_call.1']
    #allocation5 [shape = 's32[1]{0}', space=sflag, size = 0x4, scoped, tag = 'scoped memory for tpu_custom_call.1']
    #allocation6 [shape = 'u8[4096]{0}', space=vmem, size = 0x1000, scoped, tag = 'output window, operand 0, single buffered']
    %8 = vsyncpa [#allocation4], 0
    %9 = vsyncpa [#allocation5], 0
    // Predicated region
    $region2: #{tpu_custom_call.1} parent=1 // pred_check
      _
    $region3: #{tpu_custom_call.1} parent=1 // pred_check_branch
      %11 = sbr.rel (0) target = $region5
    $region4: #{tpu_custom_call.1} parent=1 // pred_region
      _
    $region5: #{tpu_custom_call.1} parent=1 // pred_fallthru
      _
    // Predicated region
    $region6: #{tpu_custom_call.1} parent=1 // pred_check
      _
    $region7: #{tpu_custom_call.1} parent=1 // pred_check_branch
      %13 = sbr.rel (0) target = $region9
    $region8: #{tpu_custom_call.1} parent=1 // pred_region
      %15 = vsyncadd [#allocation4], 0
      %s17 = sshll.u32 %s1, 4
      %s18 = int_to_ptr.hbm [resolvable:$true] %s17
      %s19 = sshll.u32 [#allocation3], 4
      %s20 = int_to_ptr.vmem [resolvable:$true] %s19
      %22 = dma.hbm_to_vmem [thread:$0]  %s18, 128, %s20, [#allocation4]
    $region9: #{tpu_custom_call.1} parent=1 // pred_fallthru
      _
    // Predicated region
    $region10: #{tpu_custom_call.1} parent=1 // pred_check
      _
    $region11: #{tpu_custom_call.1} parent=1 // pred_check_branch
      %24 = sbr.rel (0) target = $region13
    $region12: #{tpu_custom_call.1} parent=1 // pred_region
      %26 = dma.done [#allocation4], 128
    $region13: #{tpu_custom_call.1} parent=1 // pred_fallthru
      _
    %s27 = sld [smem:[#allocation2]]
    %v28 = vld [vmem:[#allocation3] sm:$0xff]
    %v29 = vstv %s27
    %v30 = vadd.f32 %v28, %v29
    %v31 = vmul.f32 %v30, 0.15915494
    %v32 = vfloor.f32 %v31
    %v33 = vmul.f32 %v32, 6.2831855
    %v34 = vsub.f32 %v30, %v33
    %vm35 = vcmp.ge.f32.partialorder %v34, 6.2831855
    %v36 = vsub.f32 %v34, 6.2831855
    %v37 = vsel %vm35, %v36, %v34
    %v38 = vmax.f32 %v37, 0.0
    %39 = vst [vmem:[#allocation6] sm:$0xff] %v38
    // Predicated region
    $region14: #{tpu_custom_call.1} parent=1 // pred_check
      _
    $region15: #{tpu_custom_call.1} parent=1 // pred_check_branch
      %41 = sbr.rel (0) target = $region17
    $region16: #{tpu_custom_call.1} parent=1 // pred_region
      %43 = vsyncadd [#allocation5], 0
      %s45 = sshll.u32 [#allocation6], 4
      %s46 = int_to_ptr.vmem [resolvable:$true] %s45
      %s47 = sshll.u32 %s2, 4
      %s48 = int_to_ptr.hbm [resolvable:$true] %s47
      %50 = dma.vmem_to_hbm [thread:$0]  %s46, 128, %s48, [#allocation5]
    $region17: #{tpu_custom_call.1} parent=1 // pred_fallthru
      _
    // Predicated region
    $region18: #{tpu_custom_call.1} parent=1 // pred_check
      _
    $region19: #{tpu_custom_call.1} parent=1 // pred_check_branch
      %52 = sbr.rel (0) target = $region21
    $region20: #{tpu_custom_call.1} parent=1 // pred_region
      %54 = dma.done [#allocation5], 128
    $region21: #{tpu_custom_call.1} parent=1 // pred_fallthru
      _
    %55 = vsyncpa [#allocation4], 1
    %56 = vsyncpa [#allocation5], 1

</llo_original>
